<compile_context>
chip_gen: v5e
topology: v5e:2x2
jax: 0.10.0
libtpu: 0.0.40
codegen_flags: <defaults>
</compile_context>

<pallas_src>
import functools
import math

import jax
import jax.numpy as jnp
from jax import lax
from jax.experimental import pallas as pl


# ---------------------------------------------------------------------------
# Fused kernel: full linear + SDPA over all batches, single invocation
# ---------------------------------------------------------------------------
def _fused_linear_sdpa_kernel(x_ref, wt_ref, b_ref, q_ref, k_ref, v_ref,
                              y_ref, o_ref, *, scale, chunk):
    # ---- Linear: y = x @ W^T + b  (W already transposed wrapper-side) ----
    # x_ref: (N, K), wt_ref: (K, M), b_ref: (1, M), y_ref: (N, M)
    y = jnp.dot(x_ref[...], wt_ref[...], preferred_element_type=jnp.float32)
    y_ref[...] = (y + b_ref[...]).astype(y_ref.dtype)

    # ---- SDPA: softmax(Q K^T * scale) V over 4-batch chunks ----
    n_chunks = q_ref.shape[0] // chunk

    def body(c, carry):
        start = pl.multiple_of(c * chunk, chunk)
        q = q_ref[pl.ds(start, chunk), :, :]
        k = k_ref[pl.ds(start, chunk), :, :]
        v = v_ref[pl.ds(start, chunk), :, :]
        # scores: (chunk, S, S) via one batched dot_general (batch dim 0)
        s = lax.dot_general(
            q, k,
            dimension_numbers=(((2,), (2,)), ((0,), (0,))),
            preferred_element_type=jnp.float32,
        ) * scale
        m = jnp.max(s, axis=-1, keepdims=True)
        p = jnp.exp(s - m)
        denom = jnp.sum(p, axis=-1, keepdims=True)
        p = p * pl.reciprocal(denom, approx=False)
        out = lax.dot_general(
            p, v,
            dimension_numbers=(((2,), (1,)), ((0,), (0,))),
            preferred_element_type=jnp.float32,
        )
        o_ref[pl.ds(start, chunk), :, :] = out.astype(o_ref.dtype)
        return carry

    lax.fori_loop(0, n_chunks, body, None)


def fused_linear_sdpa(x, w, b, query, key, value):
    n, kdim = x.shape
    m = w.shape[0]
    batch, seq_len, d_k = query.shape
    scale = 1.0 / math.sqrt(d_k)

    # One-time wrapper-side layout prep (outside the kernel).
    w_t = w.T                    # (K, M)
    b2d = b.reshape(1, m)        # (1, M)

    chunk = 4                    # 4-batch chunks keep live vregs well under 64
    assert batch % chunk == 0

    # Advisory cost hint: launch-latency-bound kernel, tell XLA it is cheap.
    flops = 2 * n * kdim * m + 2 * (2 * batch * seq_len * seq_len * d_k)
    transcendentals = batch * seq_len * seq_len
    bytes_accessed = 4 * (x.size + w.size + b.size
                          + query.size + key.size + value.size
                          + n * m + batch * seq_len * d_k)

    kernel = functools.partial(_fused_linear_sdpa_kernel, scale=scale, chunk=chunk)

    y, attn = pl.pallas_call(
        kernel,
        out_shape=(
            jax.ShapeDtypeStruct((n, m), x.dtype),
            jax.ShapeDtypeStruct((batch, seq_len, d_k), query.dtype),
        ),
        cost_estimate=pl.CostEstimate(
            flops=flops,
            transcendentals=transcendentals,
            bytes_accessed=bytes_accessed,
        ),
    )(x, w_t, b2d, query, key, value)

    return y, attn


# ---------------------------------------------------------------------------
# Module equivalent of TestLinearSDPACombined.forward
# ---------------------------------------------------------------------------
@jax.jit
def test_linear_sdpa_combined(x, query, key, value, w, b):
    return fused_linear_sdpa(x, w, b, query, key, value)


def _reference(x, query, key, value, w, b):
    y = x @ w.T + b
    scale = 1.0 / math.sqrt(query.shape[-1])
    s = jnp.einsum("bqd,bkd->bqk", query, key) * scale
    p = jax.nn.softmax(s, axis=-1)
    attn = jnp.einsum("bqk,bkd->bqd", p, value)
    return y, attn


if __name__ == "__main__":
    key0 = jax.random.PRNGKey(0)
    kx, kq, kk, kv, kw, kb = jax.random.split(key0, 6)

    # Shapes implied by the module's _get_random_inputs
    x = jax.random.uniform(kx, (8, 32), dtype=jnp.float32)
    query = jax.random.uniform(kq, (16, 10, 64), dtype=jnp.float32)
    key = jax.random.uniform(kk, (16, 10, 64), dtype=jnp.float32)
    value = jax.random.uniform(kv, (16, 10, 64), dtype=jnp.float32)

    # Deterministic parameter init for nn.Linear(32, 16): weight (16, 32), bias (16,)
    bound = 1.0 / math.sqrt(32.0)
    w = jax.random.uniform(kw, (16, 32), dtype=jnp.float32, minval=-bound, maxval=bound)
    b = jax.random.uniform(kb, (16,), dtype=jnp.float32, minval=-bound, maxval=bound)

    y, attn = test_linear_sdpa_combined(x, query, key, value, w, b)
    jax.block_until_ready((y, attn))

    y_ref, attn_ref = _reference(x, query, key, value, w, b)
    assert jnp.allclose(y, y_ref, atol=1e-5, rtol=1e-5), "linear mismatch"
    assert jnp.allclose(attn, attn_ref, atol=1e-5, rtol=1e-5), "sdpa mismatch"

    print("KERNEL_OK")
</pallas_src>

<mosaic_0001>
module attributes {stable_mosaic.version = 11 : i64} {
  func.func @_fused_linear_sdpa_kernel(%arg0: memref<8x32xf32, #tpu.memory_space<vmem>>, %arg1: memref<32x16xf32, #tpu.memory_space<vmem>>, %arg2: memref<1x16xf32, #tpu.memory_space<vmem>>, %arg3: memref<16x10x64xf32, #tpu.memory_space<vmem>>, %arg4: memref<16x10x64xf32, #tpu.memory_space<vmem>>, %arg5: memref<16x10x64xf32, #tpu.memory_space<vmem>>, %arg6: memref<8x16xf32, #tpu.memory_space<vmem>>, %arg7: memref<16x10x64xf32, #tpu.memory_space<vmem>>) attributes {dimension_semantics = [], scalar_prefetch = 0 : i64, scratch_operands = 0 : i64, tpu.core_type = #tpu.core_type<tc>} {
    %c0 = arith.constant 0 : index
    %c0_0 = arith.constant 0 : index
    %0 = vector.load %arg0[%c0, %c0_0] : memref<8x32xf32, #tpu.memory_space<vmem>>, vector<8x32xf32>
    %c0_1 = arith.constant 0 : index
    %c0_2 = arith.constant 0 : index
    %1 = vector.load %arg1[%c0_1, %c0_2] : memref<32x16xf32, #tpu.memory_space<vmem>>, vector<32x16xf32>
    %cst = arith.constant dense<0.000000e+00> : vector<8x16xf32>
    %2 = tpu.matmul %0, %1, %cst {dimension_numbers = #tpu.dot_dimension_numbers<[1], [0], [0], [1], [0, 0, 1, 1], [], []>} : vector<8x32xf32>, vector<32x16xf32>, vector<8x16xf32> -> vector<8x16xf32>
    %c0_3 = arith.constant 0 : index
    %c0_4 = arith.constant 0 : index
    %3 = vector.load %arg2[%c0_3, %c0_4] : memref<1x16xf32, #tpu.memory_space<vmem>>, vector<1x16xf32>
    %4 = vector.broadcast %3 : vector<1x16xf32> to vector<8x16xf32>
    %5 = arith.addf %2, %4 : vector<8x16xf32>
    %c0_5 = arith.constant 0 : index
    %c0_6 = arith.constant 0 : index
    %6 = vector.load %arg6[%c0_5, %c0_6] : memref<8x16xf32, #tpu.memory_space<vmem>>, vector<8x16xf32>
    tpu.vector_store %arg6[%c0_5, %c0_6], %5 {strides = array<i32>} : memref<8x16xf32, #tpu.memory_space<vmem>>, vector<8x16xf32>,
    %c0_i32 = arith.constant 0 : i32
    %c4_i32 = arith.constant 4 : i32
    %7 = arith.addi %c0_i32, %c4_i32 : i32
    %c1_i32 = arith.constant 1 : i32
    scf.for %arg8 = %c0_i32 to %7 step %c1_i32  : i32 {
      %c4_i32_8 = arith.constant 4 : i32
      %8 = arith.muli %arg8, %c4_i32_8 : i32
      %9 = tpu.assume_multiple %8, 4 : i32
      %10 = arith.index_cast %9 : i32 to index
      %c0_9 = arith.constant 0 : index
      %c0_10 = arith.constant 0 : index
      %11 = vector.load %arg3[%10, %c0_9, %c0_10] : memref<16x10x64xf32, #tpu.memory_space<vmem>>, vector<4x10x64xf32>
      %12 = arith.index_cast %9 : i32 to index
      %c0_11 = arith.constant 0 : index
      %c0_12 = arith.constant 0 : index
      %13 = vector.load %arg4[%12, %c0_11, %c0_12] : memref<16x10x64xf32, #tpu.memory_space<vmem>>, vector<4x10x64xf32>
      %14 = arith.index_cast %9 : i32 to index
      %c0_13 = arith.constant 0 : index
      %c0_14 = arith.constant 0 : index
      %15 = vector.load %arg5[%14, %c0_13, %c0_14] : memref<16x10x64xf32, #tpu.memory_space<vmem>>, vector<4x10x64xf32>
      %cst_15 = arith.constant dense<0.000000e+00> : vector<4x10x10xf32>
      %16 = tpu.matmul %11, %13, %cst_15 {dimension_numbers = #tpu.dot_dimension_numbers<[2], [2], [1], [1], [0, 0, 0, 1, 1, 1], [0], [0]>} : vector<4x10x64xf32>, vector<4x10x64xf32>, vector<4x10x10xf32> -> vector<4x10x10xf32>
      %cst_16 = arith.constant 1.250000e-01 : f32
      %17 = vector.broadcast %cst_16 : f32 to vector<4x10x10xf32>
      %18 = arith.mulf %16, %17 : vector<4x10x10xf32>
      %cst_17 = arith.constant dense<0xFF800000> : vector<4x10xf32>
      %19 = vector.multi_reduction <maximumf>, %18, %cst_17 [2] : vector<4x10x10xf32> to vector<4x10xf32>
      %20 = vector.shape_cast %19 : vector<4x10xf32> to vector<4x10x1xf32>
      %21 = vector.broadcast %20 : vector<4x10x1xf32> to vector<4x10x10xf32>
      %22 = arith.subf %18, %21 : vector<4x10x10xf32>
      %23 = math.exp %22 : vector<4x10x10xf32>
      %cst_18 = arith.constant dense<0.000000e+00> : vector<4x10xf32>
      %24 = vector.multi_reduction <add>, %23, %cst_18 [2] : vector<4x10x10xf32> to vector<4x10xf32>
      %25 = vector.shape_cast %24 : vector<4x10xf32> to vector<4x10x1xf32>
      %26 = tpu.reciprocal %25 : vector<4x10x1xf32> -> vector<4x10x1xf32>
      %27 = vector.broadcast %26 : vector<4x10x1xf32> to vector<4x10x10xf32>
      %28 = arith.mulf %23, %27 : vector<4x10x10xf32>
      %cst_19 = arith.constant dense<0.000000e+00> : vector<4x10x64xf32>
      %29 = tpu.matmul %28, %15, %cst_19 {dimension_numbers = #tpu.dot_dimension_numbers<[2], [1], [1], [2], [0, 0, 0, 1, 1, 2], [0], [0]>} : vector<4x10x10xf32>, vector<4x10x64xf32>, vector<4x10x64xf32> -> vector<4x10x64xf32>
      %30 = arith.index_cast %9 : i32 to index
      %c0_20 = arith.constant 0 : index
      %c0_21 = arith.constant 0 : index
      %31 = vector.load %arg7[%30, %c0_20, %c0_21] : memref<16x10x64xf32, #tpu.memory_space<vmem>>, vector<4x10x64xf32>
      tpu.vector_store %arg7[%30, %c0_20, %c0_21], %29 {strides = array<i32>} : memref<16x10x64xf32, #tpu.memory_space<vmem>>, vector<4x10x64xf32>,
    }
    %c4_i32_7 = arith.constant 4 : i32
    return
  }
}

</mosaic_0001>

<llo_original>
// kernel: test_linear_sdpa_combined.1
$region0: #{test_linear_sdpa_combined.1}
  #allocation0 [shape = 'u32[]', space=smem, size = 0x4, offset = 0x4, fixed_abs, tag = 'smem constant byte address 0x4 - core index']
  #allocation1 [shape = 'u32[72,128]{1,0:T(1,128)}', space=vmem, size = 0x9000, scoped, tag = 'internal scratch']
  %s0 = inlined_call_operand.vmem [shape: f32[8,32], index: 0, kind: input, shape index: {}]
  %s1 = inlined_call_operand.vmem [shape: f32[32,16], index: 1, kind: input, shape index: {}]
  %s2 = inlined_call_operand.vmem [shape: f32[1,16], index: 2, kind: input, shape index: {}]
  %s3 = inlined_call_operand.vmem [shape: f32[16,10,64], index: 3, kind: input, shape index: {}]
  %s4 = inlined_call_operand.vmem [shape: f32[16,10,64], index: 4, kind: input, shape index: {}]
  %s5 = inlined_call_operand.vmem [shape: f32[16,10,64], index: 5, kind: input, shape index: {}]
  %s6 = inlined_call_operand.hbm [shape: f32[8,16], index: 6, kind: output, shape index: {0}]
  %s7 = inlined_call_operand.vmem [shape: f32[16,10,64], index: 7, kind: output, shape index: {1}]
  %8 = xla_tuple %s6, %s7
  %s9 = sld [smem:[#allocation0]]
  $region49: #{test_linear_sdpa_combined.1} parent=0
    _
  %s11 = ssub.s32 1, %s9
  %s12 = scalar_select 0, %s11, %s9
  $region1: #{test_linear_sdpa_combined.1} parent=0
    #allocation2 [shape = 'u8[4096]{0}', space=vmem, size = 0x1000, scoped, tag = 'output window, operand 0, single buffered']
    #allocation3 [shape = 's32[1]{0}', space=sflag, size = 0x4, scoped, tag = 'scoped memory for test_linear_sdpa_combined.1']
    %13 = vsyncpa [#allocation3], 0
    // Predicated region
    $region2: #{test_linear_sdpa_combined.1} parent=1 // pred_check
      _
    $region3: #{test_linear_sdpa_combined.1} parent=1 // pred_check_branch
      %15 = sbr.rel (0) target = $region5
    $region4: #{test_linear_sdpa_combined.1} parent=1 // pred_region
      _
    $region5: #{test_linear_sdpa_combined.1} parent=1 // pred_fallthru
      _
    // Predicated region
    $region6: #{test_linear_sdpa_combined.1} parent=1 // pred_check
      _
    $region7: #{test_linear_sdpa_combined.1} parent=1 // pred_check_branch
      %17 = sbr.rel (0) target = $region9
    $region8: #{test_linear_sdpa_combined.1} parent=1 // pred_region
      _
    $region9: #{test_linear_sdpa_combined.1} parent=1 // pred_fallthru
      _
    // Predicated region
    $region10: #{test_linear_sdpa_combined.1} parent=1 // pred_check
      _
    $region11: #{test_linear_sdpa_combined.1} parent=1 // pred_check_branch
      %19 = sbr.rel (0) target = $region13
    $region12: #{test_linear_sdpa_combined.1} parent=1 // pred_region
      _
    $region13: #{test_linear_sdpa_combined.1} parent=1 // pred_fallthru
      _
    // Predicated region
    $region14: #{test_linear_sdpa_combined.1} parent=1 // pred_check
      _
    $region15: #{test_linear_sdpa_combined.1} parent=1 // pred_check_branch
      %21 = sbr.rel (0) target = $region17
    $region16: #{test_linear_sdpa_combined.1} parent=1 // pred_region
      _
    $region17: #{test_linear_sdpa_combined.1} parent=1 // pred_fallthru
      _
    // Predicated region
    $region18: #{test_linear_sdpa_combined.1} parent=1 // pred_check
      _
    $region19: #{test_linear_sdpa_combined.1} parent=1 // pred_check_branch
      %23 = sbr.rel (0) target = $region21
    $region20: #{test_linear_sdpa_combined.1} parent=1 // pred_region
      _
    $region21: #{test_linear_sdpa_combined.1} parent=1 // pred_fallthru
      _
    // Predicated region
    $region22: #{test_linear_sdpa_combined.1} parent=1 // pred_check
      _
    $region23: #{test_linear_sdpa_combined.1} parent=1 // pred_check_branch
      %25 = sbr.rel (0) target = $region25
    $region24: #{test_linear_sdpa_combined.1} parent=1 // pred_region
      _
    $region25: #{test_linear_sdpa_combined.1} parent=1 // pred_fallthru
      _
    %v26 = vld [vmem:[%s0] sm:$0xff]
    %v27 = vld [vmem:[%s1] sm:$0xff]
    %v28 = vld [vmem:[%s1 + $0x8] sm:$0xff]
    %v29 = vld [vmem:[%s1 + $0x10] sm:$0xff]
    %v30 = vld [vmem:[%s1 + $0x18] sm:$0xff]
    %v31 = vld [vmem:[%s2] sm:$0x1]
    %v33 = vperm.slane %v31, 0
    %vm35 = vcmask 261120
    %v37 = vsel %vm35, %v26, 0
    %39 = vmatpush.msra.mxu0 0.0
    %40 = vmatpush.msra.mxu0 0.0
    %41 = vmatpush.msra.mxu0 0.0
    %42 = vmatpush.msra.mxu0 0.0
    %43 = vmatpush.msra.mxu0 0.0
    %44 = vmatpush.msra.mxu0 0.0
    %45 = vmatpush.msra.mxu0 0.0
    %46 = vmatpush.msra.mxu0 0.0
    %47 = vmatpush.msra.mxu0 0.0
    %48 = vmatpush.msra.mxu0 0.0
    %49 = vmatpush.msra.mxu0 0.0
    %50 = vmatpush.msra.mxu0 0.0
    %51 = vmatpush.msra.mxu0 %v30
    %52 = vmatpush.msra.mxu0 %v29
    %53 = vmatpush.msra.mxu0 %v28
    %54 = vmatpush.msra.mxu0 %v27
    %55 = vmatmul.f32.gmra.mxu0 %v37
    %v56 = vpop.f32.mrf.mxu0
    %v57 = vadd.f32 %v33, %v56
    %58 = vdwg.mxu0
    %vm59 = vcmask 130048
    %60 = vst.msk [vmem:[#allocation2] sm:$0xff] %vm59, %v57
    loop: start=0, step=1, limit=4
    $region26: #{test_linear_sdpa_combined.1} parent=1 // loop_pre_header
      _
    $region27: #{test_linear_sdpa_combined.1} parent=1 // loop_header
      %s62 = sphi 0, %s66
      %p63 = scmp.ge.s32.totalorder %s62, 4
    $region28: #{test_linear_sdpa_combined.1} parent=1 // loop_header_branch
      %65 = sbr.rel (%p63) target = $region32
    $region29: #{test_linear_sdpa_combined.1} parent=1 // loop_body
      %s67 = smul.u32 %s62, 4
      %s68 = smul.u32 %s67, 16
      %s69 = scalar_lea.vmem %s3, %s68
      %v70 = vld [vmem:[%s69] sm:$0xff]
      %v71 = vld [vmem:[%s69 + $0x8] sm:$0x3]
      %v72 = vld [vmem:[%s69 + $0x10] sm:$0xff]
      %v73 = vld [vmem:[%s69 + $0x18] sm:$0x3]
      %v74 = vld [vmem:[%s69 + $0x20] sm:$0xff]
      %v75 = vld [vmem:[%s69 + $0x28] sm:$0x3]
      %v76 = vld [vmem:[%s69 + $0x30] sm:$0xff]
      %v77 = vld [vmem:[%s69 + $0x38] sm:$0x3]
      %s78 = scalar_lea.vmem %s4, %s68
      %v79 = vld [vmem:[%s78] sm:$0xff]
      %v80 = vld [vmem:[%s78 + $0x8] sm:$0x3]
      %v81 = vld [vmem:[%s78 + $0x10] sm:$0xff]
      %v82 = vld [vmem:[%s78 + $0x18] sm:$0x3]
      %v83 = vld [vmem:[%s78 + $0x20] sm:$0xff]
      %v84 = vld [vmem:[%s78 + $0x28] sm:$0x3]
      %v85 = vld [vmem:[%s78 + $0x30] sm:$0xff]
      %v86 = vld [vmem:[%s78 + $0x38] sm:$0x3]
      %s87 = scalar_lea.vmem %s5, %s68
      %v88 = vld [vmem:[%s87] sm:$0xff]
      %v89 = vld [vmem:[%s87 + $0x8] sm:$0x3]
      %v90 = vld [vmem:[%s87 + $0x10] sm:$0xff]
      %v91 = vld [vmem:[%s87 + $0x18] sm:$0x3]
      %v92 = vld [vmem:[%s87 + $0x20] sm:$0xff]
      %v93 = vld [vmem:[%s87 + $0x28] sm:$0x3]
      %v94 = vld [vmem:[%s87 + $0x30] sm:$0xff]
      %v95 = vld [vmem:[%s87 + $0x38] sm:$0x3]
      %vm96 = vcmask 523264
      %v98 = vsel %vm96, %v70, 0
      %v101 = vsel %vm96, %v71, 0
      %v104 = vsel %vm96, %v79, 0
      %v107 = vsel %vm96, %v80, 0
      %109 = vmatpush.xpose.msra.mxu0 0.0
      %110 = vmatpush.xpose.msra.mxu0 0.0
      %111 = vmatpush.xpose.msra.mxu0 0.0
      %112 = vmatpush.xpose.msra.mxu0 0.0
      %113 = vmatpush.xpose.msra.mxu0 0.0
      %114 = vmatpush.xpose.msra.mxu0 0.0
      %115 = vmatpush.xpose.msra.mxu0 0.0
      %116 = vmatpush.xpose.msra.mxu0 0.0
      %117 = vmatpush.xpose.msra.mxu0 0.0
      %118 = vmatpush.xpose.msra.mxu0 0.0
      %119 = vmatpush.xpose.msra.mxu0 0.0
      %120 = vmatpush.xpose.msra.mxu0 0.0
      %121 = vmatpush.xpose.msra.mxu0 0.0
      %122 = vmatpush.xpose.msra.mxu0 0.0
      %123 = vmatpush.xpose.msra.mxu0 %v107
      %124 = vmatpush.xpose.msra.mxu0 %v104
      %125 = vmatmul.f32.gmra.mxu0 %v98
      %v126 = vpop.f32.mrf.mxu0
      %v127 = vadd.f32 0.0, %v126
      %128 = vmatmul.f32.gmra.mxu0 %v101
      %v129 = vpop.f32.mrf.mxu0
      %v130 = vadd.f32 0.0, %v129
      %131 = vdwg.mxu0
      %v133 = vsel %vm96, %v72, 0
      %v136 = vsel %vm96, %v73, 0
      %v139 = vsel %vm96, %v81, 0
      %v142 = vsel %vm96, %v82, 0
      %144 = vmatpush.xpose.msra.mxu0 0.0
      %145 = vmatpush.xpose.msra.mxu0 0.0
      %146 = vmatpush.xpose.msra.mxu0 0.0
      %147 = vmatpush.xpose.msra.mxu0 0.0
      %148 = vmatpush.xpose.msra.mxu0 0.0
      %149 = vmatpush.xpose.msra.mxu0 0.0
      %150 = vmatpush.xpose.msra.mxu0 0.0
      %151 = vmatpush.xpose.msra.mxu0 0.0
      %152 = vmatpush.xpose.msra.mxu0 0.0
      %153 = vmatpush.xpose.msra.mxu0 0.0
      %154 = vmatpush.xpose.msra.mxu0 0.0
      %155 = vmatpush.xpose.msra.mxu0 0.0
      %156 = vmatpush.xpose.msra.mxu0 0.0
      %157 = vmatpush.xpose.msra.mxu0 0.0
      %158 = vmatpush.xpose.msra.mxu0 %v142
      %159 = vmatpush.xpose.msra.mxu0 %v139
      %160 = vmatmul.f32.gmra.mxu0 %v133
      %v161 = vpop.f32.mrf.mxu0
      %v162 = vadd.f32 0.0, %v161
      %163 = vmatmul.f32.gmra.mxu0 %v136
      %v164 = vpop.f32.mrf.mxu0
      %v165 = vadd.f32 0.0, %v164
      %166 = vdwg.mxu0
      %v168 = vsel %vm96, %v74, 0
      %v171 = vsel %vm96, %v75, 0
      %v174 = vsel %vm96, %v83, 0
      %v177 = vsel %vm96, %v84, 0
      %179 = vmatpush.xpose.msra.mxu0 0.0
      %180 = vmatpush.xpose.msra.mxu0 0.0
      %181 = vmatpush.xpose.msra.mxu0 0.0
      %182 = vmatpush.xpose.msra.mxu0 0.0
      %183 = vmatpush.xpose.msra.mxu0 0.0
      %184 = vmatpush.xpose.msra.mxu0 0.0
      %185 = vmatpush.xpose.msra.mxu0 0.0
      %186 = vmatpush.xpose.msra.mxu0 0.0
      %187 = vmatpush.xpose.msra.mxu0 0.0
      %188 = vmatpush.xpose.msra.mxu0 0.0
      %189 = vmatpush.xpose.msra.mxu0 0.0
      %190 = vmatpush.xpose.msra.mxu0 0.0
      %191 = vmatpush.xpose.msra.mxu0 0.0
      %192 = vmatpush.xpose.msra.mxu0 0.0
      %193 = vmatpush.xpose.msra.mxu0 %v177
      %194 = vmatpush.xpose.msra.mxu0 %v174
      %195 = vmatmul.f32.gmra.mxu0 %v168
      %v196 = vpop.f32.mrf.mxu0
      %v197 = vadd.f32 0.0, %v196
      %198 = vmatmul.f32.gmra.mxu0 %v171
      %v199 = vpop.f32.mrf.mxu0
      %v200 = vadd.f32 0.0, %v199
      %201 = vdwg.mxu0
      %v203 = vsel %vm96, %v76, 0
      %v206 = vsel %vm96, %v77, 0
      %v209 = vsel %vm96, %v85, 0
      %v212 = vsel %vm96, %v86, 0
      %214 = vmatpush.xpose.msra.mxu0 0.0
      %215 = vmatpush.xpose.msra.mxu0 0.0
      %216 = vmatpush.xpose.msra.mxu0 0.0
      %217 = vmatpush.xpose.msra.mxu0 0.0
      %218 = vmatpush.xpose.msra.mxu0 0.0
      %219 = vmatpush.xpose.msra.mxu0 0.0
      %220 = vmatpush.xpose.msra.mxu0 0.0
      %221 = vmatpush.xpose.msra.mxu0 0.0
      %222 = vmatpush.xpose.msra.mxu0 0.0
      %223 = vmatpush.xpose.msra.mxu0 0.0
      %224 = vmatpush.xpose.msra.mxu0 0.0
      %225 = vmatpush.xpose.msra.mxu0 0.0
      %226 = vmatpush.xpose.msra.mxu0 0.0
      %227 = vmatpush.xpose.msra.mxu0 0.0
      %228 = vmatpush.xpose.msra.mxu0 %v212
      %229 = vmatpush.xpose.msra.mxu0 %v209
      %230 = vmatmul.f32.gmra.mxu0 %v203
      %v231 = vpop.f32.mrf.mxu0
      %v232 = vadd.f32 0.0, %v231
      %233 = vmatmul.f32.gmra.mxu0 %v206
      %v234 = vpop.f32.mrf.mxu0
      %v235 = vadd.f32 0.0, %v234
      %236 = vdwg.mxu0
      %v237 = vmul.f32 %v127, 0.125
      %v238 = vmul.f32 %v130, 0.125
      %v239 = vmul.f32 %v162, 0.125
      %v240 = vmul.f32 %v165, 0.125
      %v241 = vmul.f32 %v197, 0.125
      %v242 = vmul.f32 %v200, 0.125
      %v243 = vmul.f32 %v232, 0.125
      %v244 = vmul.f32 %v235, 0.125
      %vm245 = vcmask 80896
      %v246 = vsel %vm245, %v237, -inf
      %247 = vmax.xlane.f32.xlu0 %v246
      %v248 = vpop.xlane.xlu0 %247
      %vm249 = vcmask 74752
      %v250 = vsel %vm249, %v238, -inf
      %251 = vmax.xlane.f32.xlu0 %v250
      %v252 = vpop.xlane.xlu0 %251
      %v253 = vsel %vm245, %v239, -inf
      %254 = vmax.xlane.f32.xlu0 %v253
      %v255 = vpop.xlane.xlu0 %254
      %v256 = vsel %vm249, %v240, -inf
      %257 = vmax.xlane.f32.xlu0 %v256
      %v258 = vpop.xlane.xlu0 %257
      %v259 = vsel %vm245, %v241, -inf
      %260 = vmax.xlane.f32.xlu0 %v259
      %v261 = vpop.xlane.xlu0 %260
      %v262 = vsel %vm249, %v242, -inf
      %263 = vmax.xlane.f32.xlu0 %v262
      %v264 = vpop.xlane.xlu0 %263
      %v265 = vsel %vm245, %v243, -inf
      %266 = vmax.xlane.f32.xlu0 %v265
      %v267 = vpop.xlane.xlu0 %266
      %v268 = vsel %vm249, %v244, -inf
      %269 = vmax.xlane.f32.xlu0 %v268
      %v270 = vpop.xlane.xlu0 %269
      %v271 = vsub.f32 %v237, %v248
      %v272 = vsub.f32 %v238, %v252
      %v273 = vsub.f32 %v239, %v255
      %v274 = vsub.f32 %v240, %v258
      %v275 = vsub.f32 %v241, %v261
      %v276 = vsub.f32 %v242, %v264
      %v277 = vsub.f32 %v243, %v267
      %v278 = vsub.f32 %v244, %v270
      %v279 = vmul.f32 %v271, 1.442695
      %v280 = vpow.pop %v279
      %v281 = vmul.f32 %v272, 1.442695
      %v282 = vpow.pop %v281
      %v283 = vmul.f32 %v273, 1.442695
      %v284 = vpow.pop %v283
      %v285 = vmul.f32 %v274, 1.442695
      %v286 = vpow.pop %v285
      %v287 = vmul.f32 %v275, 1.442695
      %v288 = vpow.pop %v287
      %v289 = vmul.f32 %v276, 1.442695
      %v290 = vpow.pop %v289
      %v291 = vmul.f32 %v277, 1.442695
      %v292 = vpow.pop %v291
      %v293 = vmul.f32 %v278, 1.442695
      %v294 = vpow.pop %v293
      %v295 = vsel %vm245, %v280, 0.0
      %296 = vadd.xlane.f32.xlu0 %v295
      %v297 = vpop.xlane.xlu0 %296
      %v298 = vsel %vm249, %v282, 0.0
      %299 = vadd.xlane.f32.xlu0 %v298
      %v300 = vpop.xlane.xlu0 %299
      %v301 = vsel %vm245, %v284, 0.0
      %302 = vadd.xlane.f32.xlu0 %v301
      %v303 = vpop.xlane.xlu0 %302
      %v304 = vsel %vm249, %v286, 0.0
      %305 = vadd.xlane.f32.xlu0 %v304
      %v306 = vpop.xlane.xlu0 %305
      %v307 = vsel %vm245, %v288, 0.0
      %308 = vadd.xlane.f32.xlu0 %v307
      %v309 = vpop.xlane.xlu0 %308
      %v310 = vsel %vm249, %v290, 0.0
      %311 = vadd.xlane.f32.xlu0 %v310
      %v312 = vpop.xlane.xlu0 %311
      %v313 = vsel %vm245, %v292, 0.0
      %314 = vadd.xlane.f32.xlu0 %v313
      %v315 = vpop.xlane.xlu0 %314
      %v316 = vsel %vm249, %v294, 0.0
      %317 = vadd.xlane.f32.xlu0 %v316
      %v318 = vpop.xlane.xlu0 %317
      %v319 = vrcp.pop %v297
      %v320 = vmul.f32 %v297, %v319
      %v321 = vsub.f32 1.0, %v320
      %v322 = vmul.f32 %v319, %v321
      %v323 = vadd.f32 %v319, %v322
      %vm324 = vweird.f32 %v297
      %vm325 = vweird.f32 %v319
      %vm326 = vmor %vm324, %vm325
      %v327 = vsel %vm326, %v319, %v323
      %v328 = vand.u32 2147483647, %v297
      %vm329 = vcmp.eq.f32.partialorder %v328, 8.507059e+37
      %v330 = vand.u32 %v297, 2147483648
      %v331 = vor.u32 1.1754944e-38, %v330
      %v332 = vsel %vm329, %v331, %v327
      %v333 = vrcp.pop %v300
      %v334 = vmul.f32 %v300, %v333
      %v335 = vsub.f32 1.0, %v334
      %v336 = vmul.f32 %v333, %v335
      %v337 = vadd.f32 %v333, %v336
      %vm338 = vweird.f32 %v300
      %vm339 = vweird.f32 %v333
      %vm340 = vmor %vm338, %vm339
      %v341 = vsel %vm340, %v333, %v337
      %v342 = vand.u32 2147483647, %v300
      %vm343 = vcmp.eq.f32.partialorder %v342, 8.507059e+37
      %v344 = vand.u32 %v300, 2147483648
      %v345 = vor.u32 1.1754944e-38, %v344
      %v346 = vsel %vm343, %v345, %v341
      %v347 = vrcp.pop %v303
      %v348 = vmul.f32 %v303, %v347
      %v349 = vsub.f32 1.0, %v348
      %v350 = vmul.f32 %v347, %v349
      %v351 = vadd.f32 %v347, %v350
      %vm352 = vweird.f32 %v303
      %vm353 = vweird.f32 %v347
      %vm354 = vmor %vm352, %vm353
      %v355 = vsel %vm354, %v347, %v351
      %v356 = vand.u32 2147483647, %v303
      %vm357 = vcmp.eq.f32.partialorder %v356, 8.507059e+37
      %v358 = vand.u32 %v303, 2147483648
      %v359 = vor.u32 1.1754944e-38, %v358
      %v360 = vsel %vm357, %v359, %v355
      %v361 = vrcp.pop %v306
      %v362 = vmul.f32 %v306, %v361
      %v363 = vsub.f32 1.0, %v362
      %v364 = vmul.f32 %v361, %v363
      %v365 = vadd.f32 %v361, %v364
      %vm366 = vweird.f32 %v306
      %vm367 = vweird.f32 %v361
      %vm368 = vmor %vm366, %vm367
      %v369 = vsel %vm368, %v361, %v365
      %v370 = vand.u32 2147483647, %v306
      %vm371 = vcmp.eq.f32.partialorder %v370, 8.507059e+37
      %v372 = vand.u32 %v306, 2147483648
      %v373 = vor.u32 1.1754944e-38, %v372
      %v374 = vsel %vm371, %v373, %v369
      %v375 = vrcp.pop %v309
      %v376 = vmul.f32 %v309, %v375
      %v377 = vsub.f32 1.0, %v376
      %v378 = vmul.f32 %v375, %v377
      %v379 = vadd.f32 %v375, %v378
      %vm380 = vweird.f32 %v309
      %vm381 = vweird.f32 %v375
      %vm382 = vmor %vm380, %vm381
      %v383 = vsel %vm382, %v375, %v379
      %v384 = vand.u32 2147483647, %v309
      %vm385 = vcmp.eq.f32.partialorder %v384, 8.507059e+37
      %v386 = vand.u32 %v309, 2147483648
      %v387 = vor.u32 1.1754944e-38, %v386
      %v388 = vsel %vm385, %v387, %v383
      %v389 = vrcp.pop %v312
      %v390 = vmul.f32 %v312, %v389
      %v391 = vsub.f32 1.0, %v390
      %v392 = vmul.f32 %v389, %v391
      %v393 = vadd.f32 %v389, %v392
      %vm394 = vweird.f32 %v312
      %vm395 = vweird.f32 %v389
      %vm396 = vmor %vm394, %vm395
      %v397 = vsel %vm396, %v389, %v393
      %v398 = vand.u32 2147483647, %v312
      %vm399 = vcmp.eq.f32.partialorder %v398, 8.507059e+37
      %v400 = vand.u32 %v312, 2147483648
      %v401 = vor.u32 1.1754944e-38, %v400
      %v402 = vsel %vm399, %v401, %v397
      %v403 = vrcp.pop %v315
      %v404 = vmul.f32 %v315, %v403
      %v405 = vsub.f32 1.0, %v404
      %v406 = vmul.f32 %v403, %v405
      %v407 = vadd.f32 %v403, %v406
      %vm408 = vweird.f32 %v315
      %vm409 = vweird.f32 %v403
      %vm410 = vmor %vm408, %vm409
      %v411 = vsel %vm410, %v403, %v407
      %v412 = vand.u32 2147483647, %v315
      %vm413 = vcmp.eq.f32.partialorder %v412, 8.507059e+37
      %v414 = vand.u32 %v315, 2147483648
      %v415 = vor.u32 1.1754944e-38, %v414
      %v416 = vsel %vm413, %v415, %v411
      %v417 = vrcp.pop %v318
      %v418 = vmul.f32 %v318, %v417
      %v419 = vsub.f32 1.0, %v418
      %v420 = vmul.f32 %v417, %v419
      %v421 = vadd.f32 %v417, %v420
      %vm422 = vweird.f32 %v318
      %vm423 = vweird.f32 %v417
      %vm424 = vmor %vm422, %vm423
      %v425 = vsel %vm424, %v417, %v421
      %v426 = vand.u32 2147483647, %v318
      %vm427 = vcmp.eq.f32.partialorder %v426, 8.507059e+37
      %v428 = vand.u32 %v318, 2147483648
      %v429 = vor.u32 1.1754944e-38, %v428
      %v430 = vsel %vm427, %v429, %v425
      %v431 = vmul.f32 %v280, %v332
      %v432 = vmul.f32 %v282, %v346
      %v433 = vmul.f32 %v284, %v360
      %v434 = vmul.f32 %v286, %v374
      %v435 = vmul.f32 %v288, %v388
      %v436 = vmul.f32 %v290, %v402
      %v437 = vmul.f32 %v292, %v416
      %v438 = vmul.f32 %v294, %v430
      %v440 = vsel %vm245, %v431, 0
      %v443 = vsel %vm245, %v432, 0
      %vm445 = vcmask 1041408
      %v447 = vsel %vm445, %v89, 0
      %449 = vmatpush.msra.mxu0 0.0
      %450 = vmatpush.msra.mxu0 0.0
      %451 = vmatpush.msra.mxu0 0.0
      %452 = vmatpush.msra.mxu0 0.0
      %453 = vmatpush.msra.mxu0 0.0
      %454 = vmatpush.msra.mxu0 0.0
      %455 = vmatpush.msra.mxu0 0.0
      %456 = vmatpush.msra.mxu0 0.0
      %457 = vmatpush.msra.mxu0 0.0
      %458 = vmatpush.msra.mxu0 0.0
      %459 = vmatpush.msra.mxu0 0.0
      %460 = vmatpush.msra.mxu0 0.0
      %461 = vmatpush.msra.mxu0 0.0
      %462 = vmatpush.msra.mxu0 0.0
      %463 = vmatpush.msra.mxu0 %v447
      %464 = vmatpush.msra.mxu0 %v88
      %465 = vmatmul.f32.gmra.mxu0 %v440
      %v466 = vpop.f32.mrf.mxu0
      %v467 = vadd.f32 0.0, %v466
      %468 = vmatmul.f32.gmra.mxu0 %v443
      %v469 = vpop.f32.mrf.mxu0
      %v470 = vadd.f32 0.0, %v469
      %471 = vdwg.mxu0
      %v473 = vsel %vm245, %v433, 0
      %v476 = vsel %vm245, %v434, 0
      %v479 = vsel %vm445, %v91, 0
      %481 = vmatpush.msra.mxu0 0.0
      %482 = vmatpush.msra.mxu0 0.0
      %483 = vmatpush.msra.mxu0 0.0
      %484 = vmatpush.msra.mxu0 0.0
      %485 = vmatpush.msra.mxu0 0.0
      %486 = vmatpush.msra.mxu0 0.0
      %487 = vmatpush.msra.mxu0 0.0
      %488 = vmatpush.msra.mxu0 0.0
      %489 = vmatpush.msra.mxu0 0.0
      %490 = vmatpush.msra.mxu0 0.0
      %491 = vmatpush.msra.mxu0 0.0
      %492 = vmatpush.msra.mxu0 0.0
      %493 = vmatpush.msra.mxu0 0.0
      %494 = vmatpush.msra.mxu0 0.0
      %495 = vmatpush.msra.mxu0 %v479
      %496 = vmatpush.msra.mxu0 %v90
      %497 = vmatmul.f32.gmra.mxu0 %v473
      %v498 = vpop.f32.mrf.mxu0
      %v499 = vadd.f32 0.0, %v498
      %500 = vmatmul.f32.gmra.mxu0 %v476
      %v501 = vpop.f32.mrf.mxu0
      %v502 = vadd.f32 0.0, %v501
      %503 = vdwg.mxu0
      %v505 = vsel %vm245, %v435, 0
      %v508 = vsel %vm245, %v436, 0
      %v511 = vsel %vm445, %v93, 0
      %513 = vmatpush.msra.mxu0 0.0
      %514 = vmatpush.msra.mxu0 0.0
      %515 = vmatpush.msra.mxu0 0.0
      %516 = vmatpush.msra.mxu0 0.0
      %517 = vmatpush.msra.mxu0 0.0
      %518 = vmatpush.msra.mxu0 0.0
      %519 = vmatpush.msra.mxu0 0.0
      %520 = vmatpush.msra.mxu0 0.0
      %521 = vmatpush.msra.mxu0 0.0
      %522 = vmatpush.msra.mxu0 0.0
      %523 = vmatpush.msra.mxu0 0.0
      %524 = vmatpush.msra.mxu0 0.0
      %525 = vmatpush.msra.mxu0 0.0
      %526 = vmatpush.msra.mxu0 0.0
      %527 = vmatpush.msra.mxu0 %v511
      %528 = vmatpush.msra.mxu0 %v92
      %529 = vmatmul.f32.gmra.mxu0 %v505
      %v530 = vpop.f32.mrf.mxu0
      %v531 = vadd.f32 0.0, %v530
      %532 = vmatmul.f32.gmra.mxu0 %v508
      %v533 = vpop.f32.mrf.mxu0
      %v534 = vadd.f32 0.0, %v533
      %535 = vdwg.mxu0
      %v537 = vsel %vm245, %v437, 0
      %v540 = vsel %vm245, %v438, 0
      %v543 = vsel %vm445, %v95, 0
      %545 = vmatpush.msra.mxu0 0.0
      %546 = vmatpush.msra.mxu0 0.0
      %547 = vmatpush.msra.mxu0 0.0
      %548 = vmatpush.msra.mxu0 0.0
      %549 = vmatpush.msra.mxu0 0.0
      %550 = vmatpush.msra.mxu0 0.0
      %551 = vmatpush.msra.mxu0 0.0
      %552 = vmatpush.msra.mxu0 0.0
      %553 = vmatpush.msra.mxu0 0.0
      %554 = vmatpush.msra.mxu0 0.0
      %555 = vmatpush.msra.mxu0 0.0
      %556 = vmatpush.msra.mxu0 0.0
      %557 = vmatpush.msra.mxu0 0.0
      %558 = vmatpush.msra.mxu0 0.0
      %559 = vmatpush.msra.mxu0 %v543
      %560 = vmatpush.msra.mxu0 %v94
      %561 = vmatmul.f32.gmra.mxu0 %v537
      %v562 = vpop.f32.mrf.mxu0
      %v563 = vadd.f32 0.0, %v562
      %564 = vmatmul.f32.gmra.mxu0 %v540
      %v565 = vpop.f32.mrf.mxu0
      %v566 = vadd.f32 0.0, %v565
      %567 = vdwg.mxu0
      %s568 = scalar_lea.vmem %s7, %s68
      %569 = vst.msk [vmem:[%s568] sm:$0xff] %vm96, %v467
      %vm570 = vcmask 517120
      %571 = vst.msk [vmem:[%s568 + $0x8] sm:$0x3] %vm570, %v470
      %572 = vst.msk [vmem:[%s568 + $0x10] sm:$0xff] %vm96, %v499
      %573 = vst.msk [vmem:[%s568 + $0x18] sm:$0x3] %vm570, %v502
      %574 = vst.msk [vmem:[%s568 + $0x20] sm:$0xff] %vm96, %v531
      %575 = vst.msk [vmem:[%s568 + $0x28] sm:$0x3] %vm570, %v534
      %576 = vst.msk [vmem:[%s568 + $0x30] sm:$0xff] %vm96, %v563
      %577 = vst.msk [vmem:[%s568 + $0x38] sm:$0x3] %vm570, %v566
    $region30: #{test_linear_sdpa_combined.1} parent=1 // loop_footer
      %s66 = sadd.s32 1, %s62
    $region31: #{test_linear_sdpa_combined.1} parent=1 // loop_footer_branch
      %61 = sbr.rel target = $region27
    $region32: #{test_linear_sdpa_combined.1} parent=1 // loop_exit
      _
    // Predicated region
    $region33: #{test_linear_sdpa_combined.1} parent=1 // pred_check
      _
    $region34: #{test_linear_sdpa_combined.1} parent=1 // pred_check_branch
      %579 = sbr.rel (0) target = $region36
    $region35: #{test_linear_sdpa_combined.1} parent=1 // pred_region
      %581 = vsyncadd [#allocation3], 0
      %s583 = sshll.u32 [#allocation2], 4
      %s584 = int_to_ptr.vmem [resolvable:$true] %s583
      %s585 = sshll.u32 %s6, 4
      %s586 = int_to_ptr.hbm [resolvable:$true] %s585
      %588 = dma.vmem_to_hbm [thread:$0]  %s584, 128, %s586, [#allocation3]
    $region36: #{test_linear_sdpa_combined.1} parent=1 // pred_fallthru
      _
    // Predicated region
    $region37: #{test_linear_sdpa_combined.1} parent=1 // pred_check
      _
    $region38: #{test_linear_sdpa_combined.1} parent=1 // pred_check_branch
      %590 = sbr.rel (0) target = $region40
    $region39: #{test_linear_sdpa_combined.1} parent=1 // pred_region
      _
    $region40: #{test_linear_sdpa_combined.1} parent=1 // pred_fallthru
      _
    // Predicated region
    $region41: #{test_linear_sdpa_combined.1} parent=1 // pred_check
      _
    $region42: #{test_linear_sdpa_combined.1} parent=1 // pred_check_branch
      %592 = sbr.rel (0) target = $region44
    $region43: #{test_linear_sdpa_combined.1} parent=1 // pred_region
      %594 = dma.done [#allocation3], 128
    $region44: #{test_linear_sdpa_combined.1} parent=1 // pred_fallthru
      _
    // Predicated region
    $region45: #{test_linear_sdpa_combined.1} parent=1 // pred_check
      _
    $region46: #{test_linear_sdpa_combined.1} parent=1 // pred_check_branch
      %596 = sbr.rel (0) target = $region48
    $region47: #{test_linear_sdpa_combined.1} parent=1 // pred_region
      _
    $region48: #{test_linear_sdpa_combined.1} parent=1 // pred_fallthru
      _
    %597 = vsyncpa [#allocation3], 1

</llo_original>
